<compile_context>
chip_gen: v7x
topology: tpu7x:2x2x1
jax: 0.10.0
libtpu: 0.0.40
codegen_flags: <defaults>
</compile_context>

<pallas_src>
import functools

import jax
import jax.numpy as jnp
from jax import lax
from jax.experimental import pallas as pl
from jax.experimental.pallas import tpu as pltpu


def _round_up(v, m):
    return ((v + m - 1) // m) * m


def _supcon_tile_kernel(z_row_ref, zt_col_ref, lab_anchor_ref, lab_other_ref,
                        loss_ref, pos_run, neg_run,
                        *, inv_temperature, n, tm, tn, lanes, mask_cols):
    i = pl.program_id(0)          # row-tile index (parallel)
    j = pl.program_id(1)          # col-tile index (reduction, innermost)
    big_neg = jnp.float32(-1e30)

    @pl.when(j == 0)
    def _init():
        pos_run[...] = jnp.full(pos_run.shape, big_neg, jnp.float32)
        neg_run[...] = jnp.full(neg_run.shape, big_neg, jnp.float32)

    # Cosine-similarity tile on the MXU: operands are already L2-normalized in the
    # wrapper (f32 or bf16), accumulation in f32.
    s = jnp.dot(z_row_ref[...], zt_col_ref[...], preferred_element_type=jnp.float32)

    if mask_cols:  # static: emitted only when N % tn != 0 (pad columns hold garbage)
        col_g = j * tn + lax.broadcasted_iota(jnp.int32, (1, tn), 1)
        s = jnp.where(col_g < n, s, big_neg)

    same = lab_anchor_ref[...] == lab_other_ref[...]       # (tm,1)==(1,tn) -> (tm,tn)

    pos_cand = jnp.where(same, s, big_neg)                 # EASY-positive candidates
    neg_cand = jnp.where(same, big_neg, s)                 # HARD-negative candidates

    # Exclude self-similarity, but only on tiles actually crossed by the diagonal
    # (scalar predicate -> lax.cond skips the iota/compare/select elsewhere).
    def _mask_diag(p):
        row_g = i * tm + lax.broadcasted_iota(jnp.int32, (tm, tn), 0)
        col_g = j * tn + lax.broadcasted_iota(jnp.int32, (tm, tn), 1)
        return jnp.where(row_g == col_g, big_neg, p)

    touches_diag = jnp.logical_and(i * tm < (j + 1) * tn, j * tn < (i + 1) * tm)
    pos_cand = lax.cond(touches_diag, _mask_diag, lambda p: p, pos_cand)

    # Lane-wise running maxima: fold (tm, tn) candidates into (tm, lanes) scratch with
    # pure-VPU elementwise maxima; no per-step cross-lane (XLU) reduction.
    pr = pos_run[...]
    nr = neg_run[...]
    for c in range(tn // lanes):                           # static unroll
        sl = slice(c * lanes, (c + 1) * lanes)
        pr = jnp.maximum(pr, pos_cand[:, sl])
        nr = jnp.maximum(nr, neg_cand[:, sl])
    pos_run[...] = pr
    neg_run[...] = nr

    @pl.when(j == pl.num_programs(1) - 1)
    def _finalize():
        # Single cross-lane reduce per row tile (instead of per grid step).
        pos_best = jnp.max(pos_run[...], axis=1, keepdims=True)   # (tm, 1)
        neg_best = jnp.max(neg_run[...], axis=1, keepdims=True)   # (tm, 1)
        # Validity (>=1 positive and >=1 negative) falls out of the masked maxima:
        # real cosine similarities are >= -1 >> -1e29.
        thresh = jnp.float32(-1e29)
        valid = jnp.logical_and(pos_best > thresh, neg_best > thresh)
        # SupConLoss on the mined {1 pos, 1 neg} pair reduces to softplus of the
        # margin (row-max / logsumexp terms cancel algebraically); stable form.
        diff = (neg_best - pos_best) * jnp.float32(inv_temperature)
        loss = jnp.maximum(diff, 0.0) + jnp.log1p(jnp.exp(-jnp.abs(diff)))
        loss_ref[...] = jnp.where(valid, loss, 0.0)


def supervised_contrastive_loss(feature_vectors, labels, temperature=0.1,
                                block_m=512, block_n=512, use_bf16=False):
    x = jnp.asarray(feature_vectors, jnp.float32)
    n, d = x.shape
    lab = jnp.squeeze(jnp.asarray(labels)).astype(jnp.int32).reshape(n)

    # L2-normalize ONCE (fused XLA pass); kernel consumes pre-normalized operands.
    z = x * lax.rsqrt(jnp.maximum(jnp.sum(x * x, axis=1, keepdims=True),
                                  jnp.float32(1e-24)))
    z_t = z.T                      # one-time transpose: clean (M,K)x(K,N) MXU feed
    if use_bf16:
        # Optional fast path: ~4x MXU throughput + half the streamed bytes.
        # Not bit-identical to the f32/PyTorch reference on near-tie mining.
        z = z.astype(jnp.bfloat16)
        z_t = z_t.astype(jnp.bfloat16)

    # Row tiles: multiple of 8 (sublane).  Keep >=2 row tiles whenever possible so the
    # "parallel" grid axis spans both TensorCores on v7x; larger tm also cuts x_t
    # re-streaming (important on v5e's lower HBM bandwidth).
    if n > block_m:
        tm = _round_up(block_m, 8)
    else:
        half = _round_up(pl.cdiv(n, 2), 8)
        tm = n if half >= n else half
    # Col tiles: multiple of 128 (lane) so the running-max fold stays lane-aligned.
    tn = n if n <= block_n else _round_up(block_n, 128)
    lanes = 128 if tn % 128 == 0 else tn

    lab_col = lab.reshape(n, 1)    # anchor labels, sublane-major
    lab_row = lab.reshape(1, n)    # comparison labels, lane-major

    grid = (pl.cdiv(n, tm), pl.cdiv(n, tn))
    kernel = functools.partial(
        _supcon_tile_kernel,
        inv_temperature=1.0 / float(temperature),
        n=n, tm=tm, tn=tn, lanes=lanes, mask_cols=(n % tn != 0),
    )

    per_anchor = pl.pallas_call(
        kernel,
        out_shape=jax.ShapeDtypeStruct((n, 1), jnp.float32),
        grid_spec=pltpu.PrefetchScalarGridSpec(
            num_scalar_prefetch=0,
            grid=grid,
            in_specs=[
                pl.BlockSpec((tm, d), lambda i, j: (i, 0)),   # normalized anchor rows
                pl.BlockSpec((d, tn), lambda i, j: (0, j)),   # normalized cols (pre-T)
                pl.BlockSpec((tm, 1), lambda i, j: (i, 0)),   # anchor labels
                pl.BlockSpec((1, tn), lambda i, j: (0, j)),   # comparison labels
            ],
            out_specs=pl.BlockSpec((tm, 1), lambda i, j: (i, 0)),
            scratch_shapes=[pltpu.VMEM((tm, lanes), jnp.float32),   # running best pos
                            pltpu.VMEM((tm, lanes), jnp.float32)],  # running best neg
        ),
        compiler_params=pltpu.CompilerParams(
            dimension_semantics=("parallel", "arbitrary"),
            vmem_limit_bytes=64 * 1024 * 1024),
    )(z, z_t, lab_col, lab_row)

    # AvgNonZeroReducer: mean over strictly-positive per-anchor losses (0 if none).
    per = per_anchor[:, 0]
    nz = (per > 0.0).astype(jnp.float32)
    cnt = jnp.sum(nz)
    total = jnp.sum(per)  # invalid / underflowed anchors are exactly 0
    return jnp.where(cnt >= 1.0, total / jnp.maximum(cnt, 1.0), jnp.float32(0.0))


def _reference(feature_vectors, labels, temperature=0.1):
    # Pure-JAX reference (mathematically identical simplified form).
    x = jnp.asarray(feature_vectors, jnp.float32)
    lab = jnp.squeeze(jnp.asarray(labels)).astype(jnp.int32)
    z = x / jnp.maximum(jnp.linalg.norm(x, axis=1, keepdims=True), 1e-12)
    s = z @ z.T
    n = s.shape[0]
    same = lab[:, None] == lab[None, :]
    eye = jnp.eye(n, dtype=bool)
    pos_mask = same & ~eye
    neg_mask = ~same
    pos_best = jnp.max(jnp.where(pos_mask, s, -1e30), axis=1)
    neg_best = jnp.max(jnp.where(neg_mask, s, -1e30), axis=1)
    valid = pos_mask.any(axis=1) & neg_mask.any(axis=1)
    per = jnp.log1p(jnp.exp((neg_best - pos_best) / temperature))
    per = jnp.where(valid, per, 0.0)
    nz = per > 0.0
    cnt = jnp.sum(nz)
    return jnp.where(cnt >= 1, jnp.sum(jnp.where(nz, per, 0.0)) / jnp.maximum(cnt, 1), 0.0)


if __name__ == "__main__":
    key = jax.random.PRNGKey(0)

    # Small, single-tile case (matches the module's typical toy batch).
    N, D = 8, 32
    feature_vectors = jax.random.normal(key, (N, D), dtype=jnp.float32)
    labels = jnp.array([[0], [0], [1], [1], [0], [1], [0], [1]], dtype=jnp.int32)
    loss = supervised_contrastive_loss(feature_vectors, labels, temperature=0.1)
    loss = jax.block_until_ready(loss)
    ref = _reference(feature_vectors, labels, temperature=0.1)
    assert jnp.allclose(loss, ref, atol=1e-4, rtol=1e-4), (loss, ref)

    # Multi-tile case: ragged column remainder, diagonal-skip, 2 row tiles.
    k1, k2 = jax.random.split(key)
    N2, D2 = 165, 32
    fv2 = jax.random.normal(k1, (N2, D2), dtype=jnp.float32)
    lab2 = jax.random.randint(k2, (N2, 1), 0, 4, dtype=jnp.int32)
    loss2 = supervised_contrastive_loss(fv2, lab2, temperature=0.1,
                                        block_m=128, block_n=128)
    loss2 = jax.block_until_ready(loss2)
    ref2 = _reference(fv2, lab2, temperature=0.1)
    assert jnp.allclose(loss2, ref2, atol=1e-4, rtol=1e-4), (loss2, ref2)

    # Multi-chunk lane fold (tn=256 -> two 128-lane chunks) + remainder masking.
    k3, k4 = jax.random.split(k1)
    N3, D3 = 384, 64
    fv3 = jax.random.normal(k3, (N3, D3), dtype=jnp.float32)
    lab3 = jax.random.randint(k4, (N3, 1), 0, 6, dtype=jnp.int32)
    loss3 = supervised_contrastive_loss(fv3, lab3, temperature=0.1,
                                        block_m=128, block_n=256)
    loss3 = jax.block_until_ready(loss3)
    ref3 = _reference(fv3, lab3, temperature=0.1)
    assert jnp.allclose(loss3, ref3, atol=1e-4, rtol=1e-4), (loss3, ref3)

    # Optional bf16 MXU feed: not bit-identical (near-tie mining), just sanity-check.
    loss_bf16 = supervised_contrastive_loss(fv3, lab3, temperature=0.1,
                                            block_m=128, block_n=256, use_bf16=True)
    loss_bf16 = jax.block_until_ready(loss_bf16)
    assert bool(jnp.isfinite(loss_bf16)), loss_bf16

    print("KERNEL_OK")
</pallas_src>

<mosaic_0001>
module attributes {stable_mosaic.version = 11 : i64} {
  func.func @_supcon_tile_kernel(%arg0: i32, %arg1: i32, %arg2: memref<8x32xf32, #tpu.memory_space<vmem>>, %arg3: memref<32x8xf32, #tpu.memory_space<vmem>>, %arg4: memref<8x1xi32, #tpu.memory_space<vmem>>, %arg5: memref<1x8xi32, #tpu.memory_space<vmem>>, %arg6: memref<8x1xf32, #tpu.memory_space<vmem>>, %arg7: memref<8x8xf32, #tpu.memory_space<vmem>>, %arg8: memref<8x8xf32, #tpu.memory_space<vmem>>) attributes {dimension_semantics = [#tpu.dimension_semantics<parallel>, #tpu.dimension_semantics<arbitrary>], iteration_bounds = array<i64: 1, 1>, scalar_prefetch = 0 : i64, scratch_operands = 2 : i64, tpu.core_type = #tpu.core_type<tc>, window_params = [{transform_indices = @transform_0, window_bounds = array<i64: 8, 32>}, {transform_indices = @transform_1, window_bounds = array<i64: 32, 8>}, {transform_indices = @transform_2, window_bounds = array<i64: 8, 1>}, {transform_indices = @transform_3, window_bounds = array<i64: 1, 8>}, {transform_indices = @transform_4, window_bounds = array<i64: 8, 1>}]} {
    %c0_i32 = arith.constant 0 : i32
    %0 = arith.cmpi eq, %arg1, %c0_i32 : i32
    %1 = arith.extui %0 : i1 to i32
    %cst = arith.constant -1.000000e+30 : f32
    %c0_i32_0 = arith.constant 0 : i32
    %2 = arith.cmpi ne, %1, %c0_i32_0 : i32
    scf.if %2 {
      %36 = vector.broadcast %cst : f32 to vector<8x8xf32>
      %c0_27 = arith.constant 0 : index
      %c0_28 = arith.constant 0 : index
      %37 = vector.load %arg7[%c0_27, %c0_28] : memref<8x8xf32, #tpu.memory_space<vmem>>, vector<8x8xf32>
      tpu.vector_store %arg7[%c0_27, %c0_28], %36 {strides = array<i32>} : memref<8x8xf32, #tpu.memory_space<vmem>>, vector<8x8xf32>,
      %38 = vector.broadcast %cst : f32 to vector<8x8xf32>
      %c0_29 = arith.constant 0 : index
      %c0_30 = arith.constant 0 : index
      %39 = vector.load %arg8[%c0_29, %c0_30] : memref<8x8xf32, #tpu.memory_space<vmem>>, vector<8x8xf32>
      tpu.vector_store %arg8[%c0_29, %c0_30], %38 {strides = array<i32>} : memref<8x8xf32, #tpu.memory_space<vmem>>, vector<8x8xf32>,
    } else {
    }
    %c0 = arith.constant 0 : index
    %c0_1 = arith.constant 0 : index
    %3 = vector.load %arg2[%c0, %c0_1] : memref<8x32xf32, #tpu.memory_space<vmem>>, vector<8x32xf32>
    %c0_2 = arith.constant 0 : index
    %c0_3 = arith.constant 0 : index
    %4 = vector.load %arg3[%c0_2, %c0_3] : memref<32x8xf32, #tpu.memory_space<vmem>>, vector<32x8xf32>
    %cst_4 = arith.constant dense<0.000000e+00> : vector<8x8xf32>
    %5 = tpu.matmul %3, %4, %cst_4 {dimension_numbers = #tpu.dot_dimension_numbers<[1], [0], [0], [1], [0, 0, 1, 1], [], []>} : vector<8x32xf32>, vector<32x8xf32>, vector<8x8xf32> -> vector<8x8xf32>
    %c0_5 = arith.constant 0 : index
    %c0_6 = arith.constant 0 : index
    %6 = vector.load %arg4[%c0_5, %c0_6] : memref<8x1xi32, #tpu.memory_space<vmem>>, vector<8x1xi32>
    %c0_7 = arith.constant 0 : index
    %c0_8 = arith.constant 0 : index
    %7 = vector.load %arg5[%c0_7, %c0_8] : memref<1x8xi32, #tpu.memory_space<vmem>>, vector<1x8xi32>
    %8 = vector.broadcast %6 : vector<8x1xi32> to vector<8x8xi32>
    %9 = vector.broadcast %7 : vector<1x8xi32> to vector<8x8xi32>
    %10 = arith.cmpi eq, %8, %9 : vector<8x8xi32>
    %cst_9 = arith.constant -1.000000e+30 : f32
    %11 = vector.broadcast %cst_9 : f32 to vector<8x8xf32>
    %12 = arith.select %10, %5, %11 : vector<8x8xi1>, vector<8x8xf32>
    %cst_10 = arith.constant -1.000000e+30 : f32
    %13 = vector.broadcast %cst_10 : f32 to vector<8x8xf32>
    %14 = arith.select %10, %13, %5 : vector<8x8xi1>, vector<8x8xf32>
    %c8_i32 = arith.constant 8 : i32
    %15 = arith.muli %arg0, %c8_i32 : i32
    %c1_i32 = arith.constant 1 : i32
    %16 = arith.addi %arg1, %c1_i32 : i32
    %c8_i32_11 = arith.constant 8 : i32
    %17 = arith.muli %16, %c8_i32_11 : i32
    %18 = arith.cmpi slt, %15, %17 : i32
    %c8_i32_12 = arith.constant 8 : i32
    %19 = arith.muli %arg1, %c8_i32_12 : i32
    %c1_i32_13 = arith.constant 1 : i32
    %20 = arith.addi %arg0, %c1_i32_13 : i32
    %c8_i32_14 = arith.constant 8 : i32
    %21 = arith.muli %20, %c8_i32_14 : i32
    %22 = arith.cmpi slt, %19, %21 : i32
    %23 = arith.andi %18, %22 : i1
    %24 = arith.extui %23 : i1 to i32
    %cst_15 = arith.constant -1.000000e+30 : f32
    %c0_i32_16 = arith.constant 0 : i32
    %25 = arith.cmpi ne, %24, %c0_i32_16 : i32
    %26 = scf.if %25 -> (vector<8x8xf32>) {
      %c8_i32_27 = arith.constant 8 : i32
      %36 = arith.muli %arg0, %c8_i32_27 : i32
      %37 = tpu.iota {dimensions = array<i32: 0>} : vector<8x8xi32>
      %38 = vector.broadcast %36 : i32 to vector<8x8xi32>
      %39 = arith.addi %38, %37 : vector<8x8xi32>
      %c8_i32_28 = arith.constant 8 : i32
      %40 = arith.muli %arg1, %c8_i32_28 : i32
      %41 = tpu.iota {dimensions = array<i32: 1>} : vector<8x8xi32>
      %42 = vector.broadcast %40 : i32 to vector<8x8xi32>
      %43 = arith.addi %42, %41 : vector<8x8xi32>
      %44 = arith.cmpi eq, %39, %43 : vector<8x8xi32>
      %45 = vector.broadcast %cst_15 : f32 to vector<8x8xf32>
      %46 = arith.select %44, %45, %12 : vector<8x8xi1>, vector<8x8xf32>
      scf.yield %46 : vector<8x8xf32>
    } else {
      scf.yield %12 : vector<8x8xf32>
    }
    %c0_17 = arith.constant 0 : index
    %c0_18 = arith.constant 0 : index
    %27 = vector.load %arg7[%c0_17, %c0_18] : memref<8x8xf32, #tpu.memory_space<vmem>>, vector<8x8xf32>
    %c0_19 = arith.constant 0 : index
    %c0_20 = arith.constant 0 : index
    %28 = vector.load %arg8[%c0_19, %c0_20] : memref<8x8xf32, #tpu.memory_space<vmem>>, vector<8x8xf32>
    %29 = arith.maximumf %27, %26 : vector<8x8xf32>
    %30 = arith.maximumf %28, %14 : vector<8x8xf32>
    %c0_21 = arith.constant 0 : index
    %c0_22 = arith.constant 0 : index
    %31 = vector.load %arg7[%c0_21, %c0_22] : memref<8x8xf32, #tpu.memory_space<vmem>>, vector<8x8xf32>
    tpu.vector_store %arg7[%c0_21, %c0_22], %29 {strides = array<i32>} : memref<8x8xf32, #tpu.memory_space<vmem>>, vector<8x8xf32>,
    %c0_23 = arith.constant 0 : index
    %c0_24 = arith.constant 0 : index
    %32 = vector.load %arg8[%c0_23, %c0_24] : memref<8x8xf32, #tpu.memory_space<vmem>>, vector<8x8xf32>
    tpu.vector_store %arg8[%c0_23, %c0_24], %30 {strides = array<i32>} : memref<8x8xf32, #tpu.memory_space<vmem>>, vector<8x8xf32>,
    %c0_i32_25 = arith.constant 0 : i32
    %33 = arith.cmpi eq, %arg1, %c0_i32_25 : i32
    %34 = arith.extui %33 : i1 to i32
    %c0_i32_26 = arith.constant 0 : i32
    %35 = arith.cmpi ne, %34, %c0_i32_26 : i32
    scf.if %35 {
      %c0_27 = arith.constant 0 : index
      %c0_28 = arith.constant 0 : index
      %36 = vector.load %arg7[%c0_27, %c0_28] : memref<8x8xf32, #tpu.memory_space<vmem>>, vector<8x8xf32>
      %cst_29 = arith.constant dense<0xFF800000> : vector<8xf32>
      %37 = vector.multi_reduction <maximumf>, %36, %cst_29 [1] : vector<8x8xf32> to vector<8xf32>
      %38 = vector.shape_cast %37 : vector<8xf32> to vector<8x1xf32>
      %c0_30 = arith.constant 0 : index
      %c0_31 = arith.constant 0 : index
      %39 = vector.load %arg8[%c0_30, %c0_31] : memref<8x8xf32, #tpu.memory_space<vmem>>, vector<8x8xf32>
      %cst_32 = arith.constant dense<0xFF800000> : vector<8xf32>
      %40 = vector.multi_reduction <maximumf>, %39, %cst_32 [1] : vector<8x8xf32> to vector<8xf32>
      %41 = vector.shape_cast %40 : vector<8xf32> to vector<8x1xf32>
      %cst_33 = arith.constant -1.000000e+29 : f32
      %42 = vector.broadcast %cst_33 : f32 to vector<8x1xf32>
      %43 = arith.cmpf ogt, %38, %42 : vector<8x1xf32>
      %cst_34 = arith.constant -1.000000e+29 : f32
      %44 = vector.broadcast %cst_34 : f32 to vector<8x1xf32>
      %45 = arith.cmpf ogt, %41, %44 : vector<8x1xf32>
      %46 = arith.andi %43, %45 : vector<8x1xi1>
      %47 = arith.subf %41, %38 : vector<8x1xf32>
      %cst_35 = arith.constant 1.000000e+01 : f32
      %48 = vector.broadcast %cst_35 : f32 to vector<8x1xf32>
      %49 = arith.mulf %47, %48 : vector<8x1xf32>
      %cst_36 = arith.constant 0.000000e+00 : f32
      %50 = vector.broadcast %cst_36 : f32 to vector<8x1xf32>
      %51 = arith.maximumf %49, %50 : vector<8x1xf32>
      %52 = math.absf %49 : vector<8x1xf32>
      %cst_37 = arith.constant 0.000000e+00 : f32
      %53 = vector.broadcast %cst_37 : f32 to vector<8x1xf32>
      %54 = arith.subf %53, %52 : vector<8x1xf32>
      %55 = math.exp %54 : vector<8x1xf32>
      %56 = math.log1p %55 : vector<8x1xf32>
      %57 = arith.addf %51, %56 : vector<8x1xf32>
      %cst_38 = arith.constant 0.000000e+00 : f32
      %58 = vector.broadcast %cst_38 : f32 to vector<8x1xf32>
      %59 = arith.select %46, %57, %58 : vector<8x1xi1>, vector<8x1xf32>
      %c0_39 = arith.constant 0 : index
      %c0_40 = arith.constant 0 : index
      %60 = vector.load %arg6[%c0_39, %c0_40] : memref<8x1xf32, #tpu.memory_space<vmem>>, vector<8x1xf32>
      tpu.vector_store %arg6[%c0_39, %c0_40], %59 {strides = array<i32>} : memref<8x1xf32, #tpu.memory_space<vmem>>, vector<8x1xf32>,
    } else {
    }
    return
  }
  func.func @transform_0(%arg0: i32, %arg1: i32) -> (i32, i32) {
    %c0_i32 = arith.constant 0 : i32
    %c0_i32_0 = arith.constant 0 : i32
    return %arg0, %c0_i32 : i32, i32
  }
  func.func @transform_1(%arg0: i32, %arg1: i32) -> (i32, i32) {
    %c0_i32 = arith.constant 0 : i32
    %c0_i32_0 = arith.constant 0 : i32
    return %c0_i32, %arg1 : i32, i32
  }
  func.func @transform_2(%arg0: i32, %arg1: i32) -> (i32, i32) {
    %c0_i32 = arith.constant 0 : i32
    %c0_i32_0 = arith.constant 0 : i32
    return %arg0, %c0_i32 : i32, i32
  }
  func.func @transform_3(%arg0: i32, %arg1: i32) -> (i32, i32) {
    %c0_i32 = arith.constant 0 : i32
    %c0_i32_0 = arith.constant 0 : i32
    return %c0_i32, %arg1 : i32, i32
  }
  func.func @transform_4(%arg0: i32, %arg1: i32) -> (i32, i32) {
    %c0_i32 = arith.constant 0 : i32
    %c0_i32_0 = arith.constant 0 : i32
    return %arg0, %c0_i32 : i32, i32
  }
}

</mosaic_0001>

<llo_original>
// kernel: tpu_custom_call.1
$region0: #{tpu_custom_call.1}
  #allocation0 [shape = 'u32[]', space=smem, size = 0x4, offset = 0x4, fixed_abs, tag = 'smem constant byte address 0x4 - core index']
  #allocation1 [shape = 'u32[144,128]{1,0:T(1,128)}', space=vmem, size = 0x12000, scoped, tag = 'internal scratch']
  #allocation2 [shape = 'f32[8,8]{1,0:T(8,128)}', space=vmem, size = 0x1000, scoped, tag = 'scratch operand']
  #allocation3 [shape = 'f32[8,8]{1,0:T(8,128)}', space=vmem, size = 0x1000, scoped, tag = 'scratch operand']
  %s0 = inlined_call_operand.hbm [shape: f32[8,32], index: 0, kind: input, shape index: {}]
  %s1 = inlined_call_operand.hbm [shape: f32[32,8], index: 1, kind: input, shape index: {}]
  %s2 = inlined_call_operand.hbm [shape: s32[8,1], index: 2, kind: input, shape index: {}]
  %s3 = inlined_call_operand.hbm [shape: s32[1,8], index: 3, kind: input, shape index: {}]
  %s4 = inlined_call_operand.hbm [shape: f32[8,1], index: 4, kind: output, shape index: {}]
  %s5 = sld [smem:[#allocation0]]
  $region58: #{tpu_custom_call.1} parent=0
    _
  %s7 = ssub.s32 1, %s5
  %s8 = scalar_select 0, %s7, %s5
  $region1: #{tpu_custom_call.1} parent=0
    #allocation4 [shape = 'u8[4096]{0}', space=vmem, size = 0x1000, scoped, tag = 'input window, operand 0, single buffered']
    #allocation5 [shape = 's32[1]{0}', space=sflag, size = 0x4, scoped, tag = 'scoped memory for tpu_custom_call.1']
    #allocation6 [shape = 's32[1]{0}', space=sflag, size = 0x4, scoped, tag = 'scoped memory for tpu_custom_call.1']
    #allocation7 [shape = 'u8[16384]{0}', space=vmem, size = 0x4000, scoped, tag = 'input window, operand 1, single buffered']
    #allocation8 [shape = 's32[1]{0}', space=sflag, size = 0x4, scoped, tag = 'scoped memory for tpu_custom_call.1']
    #allocation9 [shape = 'u8[4096]{0}', space=vmem, size = 0x1000, scoped, tag = 'input window, operand 2, single buffered']
    #allocation10 [shape = 'u8[512]{0}', space=vmem, size = 0x400, scoped, tag = 'input window, operand 3, single buffered']
    #allocation11 [shape = 's32[1]{0}', space=sflag, size = 0x4, scoped, tag = 'scoped memory for tpu_custom_call.1']
    #allocation12 [shape = 'u8[4096]{0}', space=vmem, size = 0x1000, scoped, tag = 'output window, operand 0, single buffered']
    %9 = vsyncpa [#allocation5], 0
    %10 = vsyncpa [#allocation8], 0
    %11 = vsyncpa [#allocation11], 0
    %12 = vsyncpa [#allocation6], 0
    // Predicated region
    $region2: #{tpu_custom_call.1} parent=1 // pred_check
      _
    $region3: #{tpu_custom_call.1} parent=1 // pred_check_branch
      %14 = sbr.rel (0) target = $region5
    $region4: #{tpu_custom_call.1} parent=1 // pred_region
      %s16 = ssub.s32 128, 128
      %17 = vsyncadd [#allocation5], %s16
      %s19 = sshll.u32 [#allocation4], 4
      %s20 = int_to_ptr.vmem [resolvable:$true] %s19
      %22 = dma.hbm_to_vmem [thread:$0]  %s0, 128, %s20, [#allocation5]
    $region5: #{tpu_custom_call.1} parent=1 // pred_fallthru
      _
    // Predicated region
    $region6: #{tpu_custom_call.1} parent=1 // pred_check
      _
    $region7: #{tpu_custom_call.1} parent=1 // pred_check_branch
      %24 = sbr.rel (0) target = $region9
    $region8: #{tpu_custom_call.1} parent=1 // pred_region
      %s26 = ssub.s32 512, 512
      %27 = vsyncadd [#allocation8], %s26
      %s28 = sshll.u32 [#allocation7], 4
      %s29 = int_to_ptr.vmem [resolvable:$true] %s28
      %34 = dma.hbm_to_vmem [thread:$0]  %s1, 512, %s29, [#allocation8], 128, 128, 8
    $region9: #{tpu_custom_call.1} parent=1 // pred_fallthru
      _
    // Predicated region
    $region10: #{tpu_custom_call.1} parent=1 // pred_check
      _
    $region11: #{tpu_custom_call.1} parent=1 // pred_check_branch
      %36 = sbr.rel (0) target = $region13
    $region12: #{tpu_custom_call.1} parent=1 // pred_region
      %s38 = ssub.s32 128, 128
      %39 = vsyncadd [#allocation8], %s38
      %s41 = sshll.u32 [#allocation9], 4
      %s42 = int_to_ptr.vmem [resolvable:$true] %s41
      %44 = dma.hbm_to_vmem [thread:$0]  %s2, 128, %s42, [#allocation8]
    $region13: #{tpu_custom_call.1} parent=1 // pred_fallthru
      _
    // Predicated region
    $region14: #{tpu_custom_call.1} parent=1 // pred_check
      _
    $region15: #{tpu_custom_call.1} parent=1 // pred_check_branch
      %46 = sbr.rel (0) target = $region17
    $region16: #{tpu_custom_call.1} parent=1 // pred_region
      %s48 = ssub.s32 16, 16
      %49 = vsyncadd [#allocation11], %s48
      %s51 = sshll.u32 [#allocation10], 4
      %s52 = int_to_ptr.vmem [resolvable:$true] %s51
      %54 = dma.hbm_to_vmem [thread:$0]  %s3, 16, %s52, [#allocation11]
    $region17: #{tpu_custom_call.1} parent=1 // pred_fallthru
      _
    // Predicated region
    $region18: #{tpu_custom_call.1} parent=1 // pred_check
      _
    $region19: #{tpu_custom_call.1} parent=1 // pred_check_branch
      %56 = sbr.rel (0) target = $region21
    $region20: #{tpu_custom_call.1} parent=1 // pred_region
      %57 = dma.done [#allocation5], 128
    $region21: #{tpu_custom_call.1} parent=1 // pred_fallthru
      _
    // Predicated region
    $region22: #{tpu_custom_call.1} parent=1 // pred_check
      _
    $region23: #{tpu_custom_call.1} parent=1 // pred_check_branch
      %59 = sbr.rel (0) target = $region25
    $region24: #{tpu_custom_call.1} parent=1 // pred_region
      %60 = dma.done [#allocation8], 512
    $region25: #{tpu_custom_call.1} parent=1 // pred_fallthru
      _
    // Predicated region
    $region26: #{tpu_custom_call.1} parent=1 // pred_check
      _
    $region27: #{tpu_custom_call.1} parent=1 // pred_check_branch
      %62 = sbr.rel (0) target = $region29
    $region28: #{tpu_custom_call.1} parent=1 // pred_region
      %63 = dma.done [#allocation8], 128
    $region29: #{tpu_custom_call.1} parent=1 // pred_fallthru
      _
    // Predicated region
    $region30: #{tpu_custom_call.1} parent=1 // pred_check
      _
    $region31: #{tpu_custom_call.1} parent=1 // pred_check_branch
      %65 = sbr.rel (0) target = $region33
    $region32: #{tpu_custom_call.1} parent=1 // pred_region
      %66 = dma.done [#allocation11], 16
    $region33: #{tpu_custom_call.1} parent=1 // pred_fallthru
      _
    %p67 = scmp.eq.s32.totalorder 0, 0
    // Predicated region
    $region34: #{tpu_custom_call.1} parent=1 // pred_check
      %p68 = pneg %p67
    $region35: #{tpu_custom_call.1} parent=1 // pred_check_branch
      %70 = sbr.rel (%p68) target = $region37
    $region36: #{tpu_custom_call.1} parent=1 // pred_region
      %vm71 = vcmask 64512
      %72 = vst.msk [vmem:[#allocation2] sm:$0xff] %vm71, -1e+30
      %73 = vst.msk [vmem:[#allocation3] sm:$0xff] %vm71, -1e+30
    $region37: #{tpu_custom_call.1} parent=1 // pred_fallthru
      _
    %v74 = vld [vmem:[#allocation4] sm:$0xff]
    %v75 = vld [vmem:[#allocation7] sm:$0xff]
    %v76 = vld [vmem:[#allocation7 + $0x8] sm:$0xff]
    %v77 = vld [vmem:[#allocation7 + $0x10] sm:$0xff]
    %v78 = vld [vmem:[#allocation7 + $0x18] sm:$0xff]
    %vm79 = vcmask 261120
    %v81 = vsel %vm79, %v74, 0
    %83 = vmatprep.subr.mxu0 0.0
    %84 = vmatpush1.msra.mxu0 %v75
    %85 = vmatprep.subr.mxu0 0.0
    %86 = vmatpush1.msra.mxu0 %v76
    %87 = vmatprep.subr.mxu0 0.0
    %88 = vmatpush1.msra.mxu0 %v77
    %89 = vmatprep.subr.mxu0 0.0
    %90 = vmatpush1.msra.mxu0 %v78
    %91 = vmatprep.subr.mxu0 0.0
    %92 = vmatpush1.msra.mxu0 0.0
    %93 = vmatprep.subr.mxu0 0.0
    %94 = vmatpush1.msra.mxu0 0.0
    %95 = vmatprep.subr.mxu0 0.0
    %96 = vmatpush1.msra.mxu0 0.0
    %97 = vmatprep.subr.mxu0 0.0
    %98 = vmatpush1.msra.mxu0 0.0
    %99 = vmatprep.subr.mxu0 0.0
    %100 = vmatpush1.msra.mxu0 0.0
    %101 = vmatprep.subr.mxu0 0.0
    %102 = vmatpush1.msra.mxu0 0.0
    %103 = vmatprep.subr.mxu0 0.0
    %104 = vmatpush1.msra.mxu0 0.0
    %105 = vmatprep.subr.mxu0 0.0
    %106 = vmatpush1.msra.mxu0 0.0
    %107 = vmatprep.subr.mxu0 0.0
    %108 = vmatpush1.msra.mxu0 0.0
    %109 = vmatprep.subr.mxu0 0.0
    %110 = vmatpush1.msra.mxu0 0.0
    %111 = vmatprep.subr.mxu0 0.0
    %112 = vmatpush1.msra.mxu0 0.0
    %113 = vmatprep.subr.mxu0 0.0
    %114 = vmatpush1.msra.mxu0 0.0
    %115 = vmatprep.subr.mxu0 0.0
    %116 = vmatpush1.msra.mxu0 0.0
    %117 = vmatprep.subr.mxu0 0.0
    %118 = vmatpush1.msra.mxu0 0.0
    %119 = vmatprep.subr.mxu0 0.0
    %120 = vmatpush1.msra.mxu0 0.0
    %121 = vmatprep.subr.mxu0 0.0
    %122 = vmatpush1.msra.mxu0 0.0
    %123 = vmatprep.subr.mxu0 0.0
    %124 = vmatpush1.msra.mxu0 0.0
    %125 = vmatprep.subr.mxu0 0.0
    %126 = vmatpush1.msra.mxu0 0.0
    %127 = vmatprep.subr.mxu0 0.0
    %128 = vmatpush1.msra.mxu0 0.0
    %129 = vmatprep.subr.mxu0 0.0
    %130 = vmatpush1.msra.mxu0 0.0
    %131 = vmatprep.subr.mxu0 0.0
    %132 = vmatpush1.msra.mxu0 0.0
    %133 = vmatprep.subr.mxu0 0.0
    %134 = vmatpush1.msra.mxu0 0.0
    %135 = vmatprep.subr.mxu0 0.0
    %136 = vmatpush1.msra.mxu0 0.0
    %137 = vmatprep.subr.mxu0 0.0
    %138 = vmatpush1.msra.mxu0 0.0
    %139 = vmatprep.subr.mxu0 0.0
    %140 = vmatpush1.msra.mxu0 0.0
    %141 = vmatprep.subr.mxu0 0.0
    %142 = vmatpush1.msra.mxu0 0.0
    %143 = vmatprep.subr.mxu0 0.0
    %144 = vmatpush1.msra.mxu0 0.0
    %145 = vmatprep.subr.mxu0 0.0
    %146 = vmatpush1.msra.mxu0 0.0
    %147 = vmatprep.mubr.f32.mxu0 0.0
    %148 = vmatmul.mubr.f32.gmra.mrb[0].mxu0 %v81
    %v149 = vpop.f32.mrb[0].mxu0
    %v150 = vadd.f32 0.0, %v149
    %v151 = vpop.f32.mrb[0].mxu0
    %152 = vdwg.mxu0
    %v153 = vld [vmem:[#allocation9] sm:$0xff]
    %v154 = vld [vmem:[#allocation10] sm:$0x1]
    %155 = vset.pattern.permute.xlu0 0
    %156 = vperm.xlu0 %155, %v153
    %v157 = vpop.permute.xlu0 %156
    %v158 = vlaneseq
    %v159 = vshrl.u32 %v158, 7
    %v160 = vsub.s32 0, %v159
    %v161 = vrot.slane %v154, %v160
    %vm162 = vcmp.eq.s32.totalorder %v157, %v161
    %v163 = vsel %vm162, %v150, -1e+30
    %v164 = vsel %vm162, -1e+30, %v150
    %s165 = smul.u32 0, 8
    %s166 = sadd.s32 0, 1
    %s167 = smul.u32 %s166, 8
    %p168 = scmp.lt.s32.totalorder %s165, %s167
    %s169 = smul.u32 0, 8
    %s170 = sadd.s32 0, 1
    %s171 = smul.u32 %s170, 8
    %p172 = scmp.lt.s32.totalorder %s169, %s171
    %p173 = pnand %p168, %p172
    %p174 = pneg %p173
    // Predicated region
    $region38: #{tpu_custom_call.1} parent=1 // pred_check
      _
    $region39: #{tpu_custom_call.1} parent=1 // pred_check_branch
      %176 = sbr.rel (%p173) target = $region41
    $region40: #{tpu_custom_call.1} parent=1 // pred_region
      %v177 = vlaneseq
      %v178 = vshrl.u32 %v177, 7
      %v179 = vstv %s165
      %v180 = vadd.s32 %v179, %v178
      %v181 = vlaneseq
      %v182 = vand.u32 %v181, 127
      %v183 = vstv %s169
      %v184 = vadd.s32 %v183, %v182
      %vm185 = vcmp.eq.s32.totalorder %v180, %v184
      %v186 = vsel %vm185, -1e+30, %v163
    $region41: #{tpu_custom_call.1} parent=1 // pred_fallthru
      %v187 = vphi 0, %v186
    // Predicated region
    $region42: #{tpu_custom_call.1} parent=1 // pred_check
      %p188 = pneg %p173
    $region43: #{tpu_custom_call.1} parent=1 // pred_check_branch
      %190 = sbr.rel (%p188) target = $region45
    $region44: #{tpu_custom_call.1} parent=1 // pred_region
      _
    $region45: #{tpu_custom_call.1} parent=1 // pred_fallthru
      %v191 = vphi %v187, %v163
    %v192 = vld [vmem:[#allocation2] sm:$0xff]
    %v193 = vld [vmem:[#allocation3] sm:$0xff]
    %v194 = vmax.f32 %v192, %v191
    %v195 = vmax.f32 %v193, %v164
    %vm196 = vcmask 64512
    %197 = vst.msk [vmem:[#allocation2] sm:$0xff] %vm196, %v194
    %198 = vst.msk [vmem:[#allocation3] sm:$0xff] %vm196, %v195
    // Predicated region
    $region46: #{tpu_custom_call.1} parent=1 // pred_check
      %p199 = pneg %p67
    $region47: #{tpu_custom_call.1} parent=1 // pred_check_branch
      %201 = sbr.rel (%p199) target = $region49
    $region48: #{tpu_custom_call.1} parent=1 // pred_region
      %v202 = vld [vmem:[#allocation2] sm:$0xff]
      %v203 = vsel %vm196, %v202, -inf
      %204 = vmax.xlane.f32.xlu0 %v203
      %v205 = vpop.xlane.xlu0 %204
      %v206 = vld [vmem:[#allocation3] sm:$0xff]
      %v207 = vsel %vm196, %v206, -inf
      %208 = vmax.xlane.f32.xlu0 %v207
      %v209 = vpop.xlane.xlu0 %208
      %vm210 = vcmp.gt.f32.partialorder %v205, -1e+29
      %vm211 = vcmp.gt.f32.partialorder %v209, -1e+29
      %vm212 = vmand %vm210, %vm211
      %v213 = vsub.f32 %v209, %v205
      %v214 = vmul.f32 %v213, 10.0
      %v215 = vmax.f32 %v214, 0.0
      %v216 = vand.u32 2147483647, %v214
      %v217 = vsub.f32 0.0, %v216
      %v218 = vmul.f32 %v217, 1.442695
      %v219 = vpow.pop %v218
      %v220 = vadd.f32 %v219, 1.0
      %v221 = vlog2.pop %v220
      %v222 = vmul.f32 %v221, 0.6931472
      %v223 = vmul.f32 -0.5, %v219
      %v224 = vadd.f32 %v223, 1.0
      %v225 = vmul.f32 %v224, %v219
      %v226 = vand.u32 2147483647, %v219
      %vm227 = vcmp.lt.f32.partialorder %v226, 0.0004427343
      %v228 = vsel %vm227, %v225, %v222
      %v229 = vadd.f32 %v215, %v228
      %v230 = vsel %vm212, %v229, 0.0
      %vm231 = vcmask 7168
      %232 = vst.msk [vmem:[#allocation12] sm:$0xff] %vm231, %v230
    $region49: #{tpu_custom_call.1} parent=1 // pred_fallthru
      _
    // Predicated region
    $region50: #{tpu_custom_call.1} parent=1 // pred_check
      _
    $region51: #{tpu_custom_call.1} parent=1 // pred_check_branch
      %234 = sbr.rel (0) target = $region53
    $region52: #{tpu_custom_call.1} parent=1 // pred_region
      %s236 = ssub.s32 128, 128
      %237 = vsyncadd [#allocation6], %s236
      %s239 = sshll.u32 [#allocation12], 4
      %s240 = int_to_ptr.vmem [resolvable:$true] %s239
      %242 = dma.vmem_to_hbm [thread:$0]  %s240, 128, %s4, [#allocation6]
    $region53: #{tpu_custom_call.1} parent=1 // pred_fallthru
      _
    // Predicated region
    $region54: #{tpu_custom_call.1} parent=1 // pred_check
      _
    $region55: #{tpu_custom_call.1} parent=1 // pred_check_branch
      %244 = sbr.rel (0) target = $region57
    $region56: #{tpu_custom_call.1} parent=1 // pred_region
      %245 = dma.done [#allocation6], 128
    $region57: #{tpu_custom_call.1} parent=1 // pred_fallthru
      _
    %246 = vsyncpa [#allocation5], 1
    %247 = vsyncpa [#allocation8], 1
    %248 = vsyncpa [#allocation11], 1
    %249 = vsyncpa [#allocation6], 1

</llo_original>
